<compile_context>
chip_gen: v5e
topology: v5e:2x2
jax: 0.10.0
libtpu: 0.0.40
codegen_flags: <defaults>
</compile_context>

<pallas_src>
import jax
import jax.numpy as jnp
from jax.experimental import pallas as pl
from jax.experimental.pallas import tpu as pltpu

IN_FEATURES = 1 * 1 * 8 * 2            # 16
OUT_FEATURES = 1
LANES = 128
ROWS_PER_PACK = 128                    # original batch rows per packed row
PACKED_WIDTH = ROWS_PER_PACK * IN_FEATURES   # 2048


def linear_add_relu_kernel(x_ref, w_ref, other_ref, o_ref):
    # (tm, 2048) @ (2048, 128) -> (tm, 128) on the MXU (lane-dense output).
    # NOTE: default f32 matmul precision matched the f32 reference at 1e-5 in
    # testing; pass precision=lax.Precision.HIGHEST here if bit-closeness to
    # a strict f32 reference ever matters (negligible cost).
    y = jnp.dot(x_ref[...], w_ref[...], preferred_element_type=jnp.float32)
    # + other_tensor (scalar read once from SMEM), then relu.  [VPU]
    o_ref[...] = jnp.maximum(y + other_ref[0, 0], 0.0).astype(o_ref.dtype)


def pack_weight(w):
    """(16, 1) -> (2048, 128) block-diagonal weight.  Precompute per weight."""
    return jnp.kron(jnp.eye(ROWS_PER_PACK, dtype=w.dtype), w)


def model_forward(x, w, other, *, tile_rows=512, min_pallas_batch=2048,
                  w_packed=None):
    """x: (B, 16) f32, w: (16, 1) f32, other: (1, 1) f32 -> (B, 1) f32."""
    B = x.shape[0]
    other_s = jnp.asarray(other, jnp.float32).reshape(1, 1)

    # Small-batch fast path: kernel launch + pipeline prologue dwarfs the
    # ~32*B useful flops; let XLA fuse it.
    if B < min_pallas_batch:
        return jnp.maximum(x @ w + other_s, 0.0)

    if w_packed is None:
        w_packed = pack_weight(w)

    # Pad the batch only to a multiple of 128 rows (so the packed view is a
    # free reshape).  No tile-multiple padding: the last grid tile may be
    # partial and its out-of-bounds rows are masked on writeback.
    b_padded = pl.cdiv(B, ROWS_PER_PACK) * ROWS_PER_PACK
    if b_padded != B:
        x = jnp.zeros((b_padded, IN_FEATURES), x.dtype).at[:B].set(x)
    rows = b_padded // ROWS_PER_PACK
    x_packed = x.reshape(rows, PACKED_WIDTH)         # free row-major view

    # Tile selection (packed rows):
    #   - tiny batch: one full-array tile (divisibility exempt).
    #   - otherwise: multiple of 8 sublanes, capped by tile_rows and by
    #     ~rows/2 so the grid has >= 2 steps (v7x megacore sharding).
    if rows <= 8:
        tm = rows
    else:
        half = pl.cdiv(pl.cdiv(rows, 2), 8) * 8
        tm = max(8, min(pl.cdiv(tile_rows, 8) * 8, half))
    grid = pl.cdiv(rows, tm)

    cost = pl.CostEstimate(
        flops=2 * rows * PACKED_WIDTH * LANES,
        bytes_accessed=(rows * PACKED_WIDTH * 4          # x
                        + rows * LANES * 4               # out
                        + PACKED_WIDTH * LANES * 4),     # packed weight
        transcendentals=0,
    )

    out_packed = pl.pallas_call(
        linear_add_relu_kernel,
        out_shape=jax.ShapeDtypeStruct((rows, LANES), jnp.float32),
        grid_spec=pltpu.PrefetchScalarGridSpec(
            num_scalar_prefetch=0,
            grid=(grid,),
            in_specs=[
                pl.BlockSpec((tm, PACKED_WIDTH), lambda i: (i, 0)),
                pl.BlockSpec((PACKED_WIDTH, LANES), lambda i: (0, 0)),  # resident
                pl.BlockSpec(memory_space=pltpu.MemorySpace.SMEM),
            ],
            out_specs=pl.BlockSpec((tm, LANES), lambda i: (i, 0)),
        ),
        compiler_params=pltpu.CompilerParams(
            # Batch tiles are independent -> shard across both TCs on v7x.
            dimension_semantics=("parallel",),
            # Headroom for tile sweeps (esp. v5e's 16 MiB scoped default).
            vmem_limit_bytes=32 * 1024 * 1024,
        ),
        cost_estimate=cost,
    )(x_packed, w_packed, other_s)

    # (rows, 128) row-major == original batch order; drop the padded rows.
    return out_packed.reshape(b_padded, OUT_FEATURES)[:B]


if __name__ == "__main__":
    key = jax.random.PRNGKey(0)
    k_x, k_w, k_o = jax.random.split(key, 3)

    # Small shapes consistent with the module: batch=2, features=16.
    B = 2
    x1 = jax.random.normal(k_x, (B, IN_FEATURES), dtype=jnp.float32)

    # Deterministic "parameters": Linear(16, 1, bias=False) weight stored as
    # (in, out) for the matmul, plus the synthetic other_tensor.
    bound = 1.0 / (IN_FEATURES ** 0.5)
    w = jax.random.uniform(k_w, (IN_FEATURES, OUT_FEATURES), dtype=jnp.float32,
                           minval=-bound, maxval=bound)
    other_tensor = jax.random.normal(k_o, (1, OUT_FEATURES), dtype=jnp.float32)
    w_packed = pack_weight(w)          # hoisted: packed once per weight

    def ref_fn(xv):
        return jnp.maximum(xv @ w + other_tensor, 0.0)

    # 1) Module's own shape (B=2), forcing the Pallas path.
    out = jax.block_until_ready(
        model_forward(x1, w, other_tensor, w_packed=w_packed,
                      min_pallas_batch=0))
    assert out.shape == (B, OUT_FEATURES)
    assert jnp.allclose(out, ref_fn(x1), atol=1e-5, rtol=1e-5)

    # 2) Ragged batch + multi-tile grid with a partial last tile
    #    (B=2500 -> pad to 2560 -> 20 packed rows, tm=8, grid=3).
    B2 = 2500
    x2 = jax.random.normal(k_x, (B2, IN_FEATURES), dtype=jnp.float32)
    out2 = jax.block_until_ready(
        model_forward(x2, w, other_tensor, w_packed=w_packed,
                      min_pallas_batch=0, tile_rows=8))
    assert jnp.allclose(out2, ref_fn(x2), atol=1e-5, rtol=1e-5)

    # 3) Small-batch fast path (skips Pallas by default).
    out3 = jax.block_until_ready(
        model_forward(x1, w, other_tensor, w_packed=w_packed))
    assert jnp.allclose(out3, ref_fn(x1), atol=1e-5, rtol=1e-5)

    print("KERNEL_OK")
</pallas_src>

<mosaic_0001>
module attributes {stable_mosaic.version = 11 : i64} {
  func.func @linear_add_relu_kernel(%arg0: i32, %arg1: memref<1x2048xf32, #tpu.memory_space<vmem>>, %arg2: memref<2048x128xf32, #tpu.memory_space<vmem>>, %arg3: memref<1x1xf32, #tpu.memory_space<smem>>, %arg4: memref<1x128xf32, #tpu.memory_space<vmem>>) attributes {dimension_semantics = [#tpu.dimension_semantics<parallel>], iteration_bounds = array<i64: 1>, scalar_prefetch = 0 : i64, scratch_operands = 0 : i64, tpu.core_type = #tpu.core_type<tc>, window_params = [{transform_indices = @transform_0, window_bounds = array<i64: 1, 2048>}, {pipeline_mode = #tpu.pipeline_mode<synchronous>, transform_indices = @transform_1, window_bounds = array<i64: 2048, 128>}, {transform_indices = @transform_2, window_bounds = array<i64: 1, 1>}, {transform_indices = @transform_3, window_bounds = array<i64: 1, 128>}]} {
    %c0 = arith.constant 0 : index
    %c0_0 = arith.constant 0 : index
    %0 = vector.load %arg1[%c0, %c0_0] : memref<1x2048xf32, #tpu.memory_space<vmem>>, vector<1x2048xf32>
    %c0_1 = arith.constant 0 : index
    %c0_2 = arith.constant 0 : index
    %1 = vector.load %arg2[%c0_1, %c0_2] : memref<2048x128xf32, #tpu.memory_space<vmem>>, vector<2048x128xf32>
    %cst = arith.constant dense<0.000000e+00> : vector<1x128xf32>
    %2 = tpu.matmul %0, %1, %cst {dimension_numbers = #tpu.dot_dimension_numbers<[1], [0], [0], [1], [0, 0, 1, 1], [], []>} : vector<1x2048xf32>, vector<2048x128xf32>, vector<1x128xf32> -> vector<1x128xf32>
    %c0_3 = arith.constant 0 : index
    %c0_4 = arith.constant 0 : index
    %3 = memref.load %arg3[%c0_3, %c0_4] : memref<1x1xf32, #tpu.memory_space<smem>>
    %4 = vector.broadcast %3 : f32 to vector<1x128xf32>
    %5 = arith.addf %2, %4 : vector<1x128xf32>
    %cst_5 = arith.constant 0.000000e+00 : f32
    %6 = vector.broadcast %cst_5 : f32 to vector<1x128xf32>
    %7 = arith.maximumf %5, %6 : vector<1x128xf32>
    %c0_6 = arith.constant 0 : index
    %c0_7 = arith.constant 0 : index
    %8 = vector.load %arg4[%c0_6, %c0_7] : memref<1x128xf32, #tpu.memory_space<vmem>>, vector<1x128xf32>
    tpu.vector_store %arg4[%c0_6, %c0_7], %7 {strides = array<i32>} : memref<1x128xf32, #tpu.memory_space<vmem>>, vector<1x128xf32>,
    return
  }
  func.func @transform_0(%arg0: i32) -> (i32, i32) {
    %c0_i32 = arith.constant 0 : i32
    %c0_i32_0 = arith.constant 0 : i32
    return %arg0, %c0_i32 : i32, i32
  }
  func.func @transform_1(%arg0: i32) -> (i32, i32) {
    %c0_i32 = arith.constant 0 : i32
    %c0_i32_0 = arith.constant 0 : i32
    %c0_i32_1 = arith.constant 0 : i32
    return %c0_i32, %c0_i32_0 : i32, i32
  }
  func.func @transform_2(%arg0: i32) -> (i32, i32) {
    %c0_i32 = arith.constant 0 : i32
    %c0_i32_0 = arith.constant 0 : i32
    %c0_i32_1 = arith.constant 0 : i32
    return %c0_i32, %c0_i32_0 : i32, i32
  }
  func.func @transform_3(%arg0: i32) -> (i32, i32) {
    %c0_i32 = arith.constant 0 : i32
    %c0_i32_0 = arith.constant 0 : i32
    return %arg0, %c0_i32 : i32, i32
  }
}

</mosaic_0001>

<llo_original>
// kernel: tpu_custom_call.1
$region0: #{tpu_custom_call.1}
  #allocation0 [shape = 'u32[]', space=smem, size = 0x4, offset = 0x4, fixed_abs, tag = 'smem constant byte address 0x4 - core index']
  #allocation1 [shape = 'u32[72,128]{1,0:T(1,128)}', space=vmem, size = 0x9000, scoped, tag = 'internal scratch']
  #allocation2 [shape = 'f32[1,1]{1,0:T(1,128)S(6)}', space=smem, size = 0x200, scoped, tag = 'scoped memory for tpu_custom_call.1']
  %s0 = inlined_call_operand.hbm [shape: f32[1,2048], index: 0, kind: input, shape index: {}]
  %s1 = inlined_call_operand.hbm [shape: f32[2048,128], index: 1, kind: input, shape index: {}]
  %s2 = inlined_call_operand.<no memory space> [shape: f32[1,1], index: 2, kind: input, shape index: {}]
  %s3 = inlined_call_operand.hbm [shape: f32[1,128], index: 3, kind: output, shape index: {}]
  %s4 = sld [smem:[#allocation0]]
  $region30: #{tpu_custom_call.1} parent=0
    _
  %s6 = ssub.s32 1, %s4
  %s7 = scalar_select 0, %s6, %s4
  %8 = sst [smem:[#allocation2]] %s2
  $region1: #{tpu_custom_call.1} parent=0
    #allocation3 [shape = 'u8[8192]{0}', space=vmem, size = 0x2000, scoped, tag = 'input window, operand 0, single buffered']
    #allocation4 [shape = 's32[1]{0}', space=sflag, size = 0x4, scoped, tag = 'scoped memory for tpu_custom_call.1']
    #allocation5 [shape = 's32[1]{0}', space=sflag, size = 0x4, scoped, tag = 'scoped memory for tpu_custom_call.1']
    #allocation6 [shape = 'u8[1048576]{0}', space=vmem, size = 0x100000, scoped, tag = 'input window, operand 1, single buffered']
    #allocation7 [shape = 's32[1]{0}', space=sflag, size = 0x4, scoped, tag = 'scoped memory for tpu_custom_call.1']
    #allocation8 [shape = 'u8[512]{0}', space=vmem, size = 0x400, scoped, tag = 'output window, operand 0, single buffered']
    %9 = vsyncpa [#allocation4], 0
    %10 = vsyncpa [#allocation7], 0
    %11 = vsyncpa [#allocation5], 0
    // Predicated region
    $region2: #{tpu_custom_call.1} parent=1 // pred_check
      _
    $region3: #{tpu_custom_call.1} parent=1 // pred_check_branch
      %13 = sbr.rel (0) target = $region5
    $region4: #{tpu_custom_call.1} parent=1 // pred_region
      %15 = vsyncadd [#allocation4], 0
      %s17 = sshll.u32 %s0, 4
      %s18 = int_to_ptr.hbm [resolvable:$true] %s17
      %s19 = sshll.u32 [#allocation3], 4
      %s20 = int_to_ptr.vmem [resolvable:$true] %s19
      %22 = dma.hbm_to_vmem [thread:$0]  %s18, 256, %s20, [#allocation4]
    $region5: #{tpu_custom_call.1} parent=1 // pred_fallthru
      _
    // Predicated region
    $region6: #{tpu_custom_call.1} parent=1 // pred_check
      _
    $region7: #{tpu_custom_call.1} parent=1 // pred_check_branch
      %24 = sbr.rel (0) target = $region9
    $region8: #{tpu_custom_call.1} parent=1 // pred_region
      %26 = vsyncadd [#allocation7], 0
      %s27 = sshll.u32 %s1, 4
      %s28 = int_to_ptr.hbm [resolvable:$true] %s27
      %s29 = sshll.u32 [#allocation6], 4
      %s30 = int_to_ptr.vmem [resolvable:$true] %s29
      %35 = dma.hbm_to_vmem [thread:$0]  %s28, 32768, %s30, [#allocation7], 128, 128, 8
    $region9: #{tpu_custom_call.1} parent=1 // pred_fallthru
      _
    // Predicated region
    $region10: #{tpu_custom_call.1} parent=1 // pred_check
      _
    $region11: #{tpu_custom_call.1} parent=1 // pred_check_branch
      %37 = sbr.rel (0) target = $region13
    $region12: #{tpu_custom_call.1} parent=1 // pred_region
      _
    $region13: #{tpu_custom_call.1} parent=1 // pred_fallthru
      _
    // Predicated region
    $region14: #{tpu_custom_call.1} parent=1 // pred_check
      _
    $region15: #{tpu_custom_call.1} parent=1 // pred_check_branch
      %39 = sbr.rel (0) target = $region17
    $region16: #{tpu_custom_call.1} parent=1 // pred_region
      %41 = dma.done [#allocation4], 256
    $region17: #{tpu_custom_call.1} parent=1 // pred_fallthru
      _
    // Predicated region
    $region18: #{tpu_custom_call.1} parent=1 // pred_check
      _
    $region19: #{tpu_custom_call.1} parent=1 // pred_check_branch
      %43 = sbr.rel (0) target = $region21
    $region20: #{tpu_custom_call.1} parent=1 // pred_region
      %45 = dma.done [#allocation7], 32768
    $region21: #{tpu_custom_call.1} parent=1 // pred_fallthru
      _
    %v46 = vld [vmem:[#allocation3] sm:$0xff]
    %v47 = vld [vmem:[#allocation3 + $0x8] sm:$0xff]
    %v48 = vld [vmem:[#allocation6] sm:$0xff]
    %v49 = vld [vmem:[#allocation6 + $0x8] sm:$0xff]
    %v50 = vld [vmem:[#allocation6 + $0x10] sm:$0xff]
    %v51 = vld [vmem:[#allocation6 + $0x18] sm:$0xff]
    %v52 = vld [vmem:[#allocation6 + $0x20] sm:$0xff]
    %v53 = vld [vmem:[#allocation6 + $0x28] sm:$0xff]
    %v54 = vld [vmem:[#allocation6 + $0x30] sm:$0xff]
    %v55 = vld [vmem:[#allocation6 + $0x38] sm:$0xff]
    %v56 = vld [vmem:[#allocation6 + $0x40] sm:$0xff]
    %v57 = vld [vmem:[#allocation6 + $0x48] sm:$0xff]
    %v58 = vld [vmem:[#allocation6 + $0x50] sm:$0xff]
    %v59 = vld [vmem:[#allocation6 + $0x58] sm:$0xff]
    %v60 = vld [vmem:[#allocation6 + $0x60] sm:$0xff]
    %v61 = vld [vmem:[#allocation6 + $0x68] sm:$0xff]
    %v62 = vld [vmem:[#allocation6 + $0x70] sm:$0xff]
    %v63 = vld [vmem:[#allocation6 + $0x78] sm:$0xff]
    %v64 = vld [vmem:[#allocation6 + $0x80] sm:$0xff]
    %v65 = vld [vmem:[#allocation6 + $0x88] sm:$0xff]
    %v66 = vld [vmem:[#allocation6 + $0x90] sm:$0xff]
    %v67 = vld [vmem:[#allocation6 + $0x98] sm:$0xff]
    %v68 = vld [vmem:[#allocation6 + $0xa0] sm:$0xff]
    %v69 = vld [vmem:[#allocation6 + $0xa8] sm:$0xff]
    %v70 = vld [vmem:[#allocation6 + $0xb0] sm:$0xff]
    %v71 = vld [vmem:[#allocation6 + $0xb8] sm:$0xff]
    %v72 = vld [vmem:[#allocation6 + $0xc0] sm:$0xff]
    %v73 = vld [vmem:[#allocation6 + $0xc8] sm:$0xff]
    %v74 = vld [vmem:[#allocation6 + $0xd0] sm:$0xff]
    %v75 = vld [vmem:[#allocation6 + $0xd8] sm:$0xff]
    %v76 = vld [vmem:[#allocation6 + $0xe0] sm:$0xff]
    %v77 = vld [vmem:[#allocation6 + $0xe8] sm:$0xff]
    %v78 = vld [vmem:[#allocation6 + $0xf0] sm:$0xff]
    %v79 = vld [vmem:[#allocation6 + $0xf8] sm:$0xff]
    %v80 = vld [vmem:[#allocation6 + $0x100] sm:$0xff]
    %v81 = vld [vmem:[#allocation6 + $0x108] sm:$0xff]
    %v82 = vld [vmem:[#allocation6 + $0x110] sm:$0xff]
    %v83 = vld [vmem:[#allocation6 + $0x118] sm:$0xff]
    %v84 = vld [vmem:[#allocation6 + $0x120] sm:$0xff]
    %v85 = vld [vmem:[#allocation6 + $0x128] sm:$0xff]
    %v86 = vld [vmem:[#allocation6 + $0x130] sm:$0xff]
    %v87 = vld [vmem:[#allocation6 + $0x138] sm:$0xff]
    %v88 = vld [vmem:[#allocation6 + $0x140] sm:$0xff]
    %v89 = vld [vmem:[#allocation6 + $0x148] sm:$0xff]
    %v90 = vld [vmem:[#allocation6 + $0x150] sm:$0xff]
    %v91 = vld [vmem:[#allocation6 + $0x158] sm:$0xff]
    %v92 = vld [vmem:[#allocation6 + $0x160] sm:$0xff]
    %v93 = vld [vmem:[#allocation6 + $0x168] sm:$0xff]
    %v94 = vld [vmem:[#allocation6 + $0x170] sm:$0xff]
    %v95 = vld [vmem:[#allocation6 + $0x178] sm:$0xff]
    %v96 = vld [vmem:[#allocation6 + $0x180] sm:$0xff]
    %v97 = vld [vmem:[#allocation6 + $0x188] sm:$0xff]
    %v98 = vld [vmem:[#allocation6 + $0x190] sm:$0xff]
    %v99 = vld [vmem:[#allocation6 + $0x198] sm:$0xff]
    %v100 = vld [vmem:[#allocation6 + $0x1a0] sm:$0xff]
    %v101 = vld [vmem:[#allocation6 + $0x1a8] sm:$0xff]
    %v102 = vld [vmem:[#allocation6 + $0x1b0] sm:$0xff]
    %v103 = vld [vmem:[#allocation6 + $0x1b8] sm:$0xff]
    %v104 = vld [vmem:[#allocation6 + $0x1c0] sm:$0xff]
    %v105 = vld [vmem:[#allocation6 + $0x1c8] sm:$0xff]
    %v106 = vld [vmem:[#allocation6 + $0x1d0] sm:$0xff]
    %v107 = vld [vmem:[#allocation6 + $0x1d8] sm:$0xff]
    %v108 = vld [vmem:[#allocation6 + $0x1e0] sm:$0xff]
    %v109 = vld [vmem:[#allocation6 + $0x1e8] sm:$0xff]
    %v110 = vld [vmem:[#allocation6 + $0x1f0] sm:$0xff]
    %v111 = vld [vmem:[#allocation6 + $0x1f8] sm:$0xff]
    %v112 = vld [vmem:[#allocation6 + $0x200] sm:$0xff]
    %v113 = vld [vmem:[#allocation6 + $0x208] sm:$0xff]
    %v114 = vld [vmem:[#allocation6 + $0x210] sm:$0xff]
    %v115 = vld [vmem:[#allocation6 + $0x218] sm:$0xff]
    %v116 = vld [vmem:[#allocation6 + $0x220] sm:$0xff]
    %v117 = vld [vmem:[#allocation6 + $0x228] sm:$0xff]
    %v118 = vld [vmem:[#allocation6 + $0x230] sm:$0xff]
    %v119 = vld [vmem:[#allocation6 + $0x238] sm:$0xff]
    %v120 = vld [vmem:[#allocation6 + $0x240] sm:$0xff]
    %v121 = vld [vmem:[#allocation6 + $0x248] sm:$0xff]
    %v122 = vld [vmem:[#allocation6 + $0x250] sm:$0xff]
    %v123 = vld [vmem:[#allocation6 + $0x258] sm:$0xff]
    %v124 = vld [vmem:[#allocation6 + $0x260] sm:$0xff]
    %v125 = vld [vmem:[#allocation6 + $0x268] sm:$0xff]
    %v126 = vld [vmem:[#allocation6 + $0x270] sm:$0xff]
    %v127 = vld [vmem:[#allocation6 + $0x278] sm:$0xff]
    %v128 = vld [vmem:[#allocation6 + $0x280] sm:$0xff]
    %v129 = vld [vmem:[#allocation6 + $0x288] sm:$0xff]
    %v130 = vld [vmem:[#allocation6 + $0x290] sm:$0xff]
    %v131 = vld [vmem:[#allocation6 + $0x298] sm:$0xff]
    %v132 = vld [vmem:[#allocation6 + $0x2a0] sm:$0xff]
    %v133 = vld [vmem:[#allocation6 + $0x2a8] sm:$0xff]
    %v134 = vld [vmem:[#allocation6 + $0x2b0] sm:$0xff]
    %v135 = vld [vmem:[#allocation6 + $0x2b8] sm:$0xff]
    %v136 = vld [vmem:[#allocation6 + $0x2c0] sm:$0xff]
    %v137 = vld [vmem:[#allocation6 + $0x2c8] sm:$0xff]
    %v138 = vld [vmem:[#allocation6 + $0x2d0] sm:$0xff]
    %v139 = vld [vmem:[#allocation6 + $0x2d8] sm:$0xff]
    %v140 = vld [vmem:[#allocation6 + $0x2e0] sm:$0xff]
    %v141 = vld [vmem:[#allocation6 + $0x2e8] sm:$0xff]
    %v142 = vld [vmem:[#allocation6 + $0x2f0] sm:$0xff]
    %v143 = vld [vmem:[#allocation6 + $0x2f8] sm:$0xff]
    %v144 = vld [vmem:[#allocation6 + $0x300] sm:$0xff]
    %v145 = vld [vmem:[#allocation6 + $0x308] sm:$0xff]
    %v146 = vld [vmem:[#allocation6 + $0x310] sm:$0xff]
    %v147 = vld [vmem:[#allocation6 + $0x318] sm:$0xff]
    %v148 = vld [vmem:[#allocation6 + $0x320] sm:$0xff]
    %v149 = vld [vmem:[#allocation6 + $0x328] sm:$0xff]
    %v150 = vld [vmem:[#allocation6 + $0x330] sm:$0xff]
    %v151 = vld [vmem:[#allocation6 + $0x338] sm:$0xff]
    %v152 = vld [vmem:[#allocation6 + $0x340] sm:$0xff]
    %v153 = vld [vmem:[#allocation6 + $0x348] sm:$0xff]
    %v154 = vld [vmem:[#allocation6 + $0x350] sm:$0xff]
    %v155 = vld [vmem:[#allocation6 + $0x358] sm:$0xff]
    %v156 = vld [vmem:[#allocation6 + $0x360] sm:$0xff]
    %v157 = vld [vmem:[#allocation6 + $0x368] sm:$0xff]
    %v158 = vld [vmem:[#allocation6 + $0x370] sm:$0xff]
    %v159 = vld [vmem:[#allocation6 + $0x378] sm:$0xff]
    %v160 = vld [vmem:[#allocation6 + $0x380] sm:$0xff]
    %v161 = vld [vmem:[#allocation6 + $0x388] sm:$0xff]
    %v162 = vld [vmem:[#allocation6 + $0x390] sm:$0xff]
    %v163 = vld [vmem:[#allocation6 + $0x398] sm:$0xff]
    %v164 = vld [vmem:[#allocation6 + $0x3a0] sm:$0xff]
    %v165 = vld [vmem:[#allocation6 + $0x3a8] sm:$0xff]
    %v166 = vld [vmem:[#allocation6 + $0x3b0] sm:$0xff]
    %v167 = vld [vmem:[#allocation6 + $0x3b8] sm:$0xff]
    %v168 = vld [vmem:[#allocation6 + $0x3c0] sm:$0xff]
    %v169 = vld [vmem:[#allocation6 + $0x3c8] sm:$0xff]
    %v170 = vld [vmem:[#allocation6 + $0x3d0] sm:$0xff]
    %v171 = vld [vmem:[#allocation6 + $0x3d8] sm:$0xff]
    %v172 = vld [vmem:[#allocation6 + $0x3e0] sm:$0xff]
    %v173 = vld [vmem:[#allocation6 + $0x3e8] sm:$0xff]
    %v174 = vld [vmem:[#allocation6 + $0x3f0] sm:$0xff]
    %v175 = vld [vmem:[#allocation6 + $0x3f8] sm:$0xff]
    %v176 = vld [vmem:[#allocation6 + $0x400] sm:$0xff]
    %v177 = vld [vmem:[#allocation6 + $0x408] sm:$0xff]
    %v178 = vld [vmem:[#allocation6 + $0x410] sm:$0xff]
    %v179 = vld [vmem:[#allocation6 + $0x418] sm:$0xff]
    %v180 = vld [vmem:[#allocation6 + $0x420] sm:$0xff]
    %v181 = vld [vmem:[#allocation6 + $0x428] sm:$0xff]
    %v182 = vld [vmem:[#allocation6 + $0x430] sm:$0xff]
    %v183 = vld [vmem:[#allocation6 + $0x438] sm:$0xff]
    %v184 = vld [vmem:[#allocation6 + $0x440] sm:$0xff]
    %v185 = vld [vmem:[#allocation6 + $0x448] sm:$0xff]
    %v186 = vld [vmem:[#allocation6 + $0x450] sm:$0xff]
    %v187 = vld [vmem:[#allocation6 + $0x458] sm:$0xff]
    %v188 = vld [vmem:[#allocation6 + $0x460] sm:$0xff]
    %v189 = vld [vmem:[#allocation6 + $0x468] sm:$0xff]
    %v190 = vld [vmem:[#allocation6 + $0x470] sm:$0xff]
    %v191 = vld [vmem:[#allocation6 + $0x478] sm:$0xff]
    %v192 = vld [vmem:[#allocation6 + $0x480] sm:$0xff]
    %v193 = vld [vmem:[#allocation6 + $0x488] sm:$0xff]
    %v194 = vld [vmem:[#allocation6 + $0x490] sm:$0xff]
    %v195 = vld [vmem:[#allocation6 + $0x498] sm:$0xff]
    %v196 = vld [vmem:[#allocation6 + $0x4a0] sm:$0xff]
    %v197 = vld [vmem:[#allocation6 + $0x4a8] sm:$0xff]
    %v198 = vld [vmem:[#allocation6 + $0x4b0] sm:$0xff]
    %v199 = vld [vmem:[#allocation6 + $0x4b8] sm:$0xff]
    %v200 = vld [vmem:[#allocation6 + $0x4c0] sm:$0xff]
    %v201 = vld [vmem:[#allocation6 + $0x4c8] sm:$0xff]
    %v202 = vld [vmem:[#allocation6 + $0x4d0] sm:$0xff]
    %v203 = vld [vmem:[#allocation6 + $0x4d8] sm:$0xff]
    %v204 = vld [vmem:[#allocation6 + $0x4e0] sm:$0xff]
    %v205 = vld [vmem:[#allocation6 + $0x4e8] sm:$0xff]
    %v206 = vld [vmem:[#allocation6 + $0x4f0] sm:$0xff]
    %v207 = vld [vmem:[#allocation6 + $0x4f8] sm:$0xff]
    %v208 = vld [vmem:[#allocation6 + $0x500] sm:$0xff]
    %v209 = vld [vmem:[#allocation6 + $0x508] sm:$0xff]
    %v210 = vld [vmem:[#allocation6 + $0x510] sm:$0xff]
    %v211 = vld [vmem:[#allocation6 + $0x518] sm:$0xff]
    %v212 = vld [vmem:[#allocation6 + $0x520] sm:$0xff]
    %v213 = vld [vmem:[#allocation6 + $0x528] sm:$0xff]
    %v214 = vld [vmem:[#allocation6 + $0x530] sm:$0xff]
    %v215 = vld [vmem:[#allocation6 + $0x538] sm:$0xff]
    %v216 = vld [vmem:[#allocation6 + $0x540] sm:$0xff]
    %v217 = vld [vmem:[#allocation6 + $0x548] sm:$0xff]
    %v218 = vld [vmem:[#allocation6 + $0x550] sm:$0xff]
    %v219 = vld [vmem:[#allocation6 + $0x558] sm:$0xff]
    %v220 = vld [vmem:[#allocation6 + $0x560] sm:$0xff]
    %v221 = vld [vmem:[#allocation6 + $0x568] sm:$0xff]
    %v222 = vld [vmem:[#allocation6 + $0x570] sm:$0xff]
    %v223 = vld [vmem:[#allocation6 + $0x578] sm:$0xff]
    %v224 = vld [vmem:[#allocation6 + $0x580] sm:$0xff]
    %v225 = vld [vmem:[#allocation6 + $0x588] sm:$0xff]
    %v226 = vld [vmem:[#allocation6 + $0x590] sm:$0xff]
    %v227 = vld [vmem:[#allocation6 + $0x598] sm:$0xff]
    %v228 = vld [vmem:[#allocation6 + $0x5a0] sm:$0xff]
    %v229 = vld [vmem:[#allocation6 + $0x5a8] sm:$0xff]
    %v230 = vld [vmem:[#allocation6 + $0x5b0] sm:$0xff]
    %v231 = vld [vmem:[#allocation6 + $0x5b8] sm:$0xff]
    %v232 = vld [vmem:[#allocation6 + $0x5c0] sm:$0xff]
    %v233 = vld [vmem:[#allocation6 + $0x5c8] sm:$0xff]
    %v234 = vld [vmem:[#allocation6 + $0x5d0] sm:$0xff]
    %v235 = vld [vmem:[#allocation6 + $0x5d8] sm:$0xff]
    %v236 = vld [vmem:[#allocation6 + $0x5e0] sm:$0xff]
    %v237 = vld [vmem:[#allocation6 + $0x5e8] sm:$0xff]
    %v238 = vld [vmem:[#allocation6 + $0x5f0] sm:$0xff]
    %v239 = vld [vmem:[#allocation6 + $0x5f8] sm:$0xff]
    %v240 = vld [vmem:[#allocation6 + $0x600] sm:$0xff]
    %v241 = vld [vmem:[#allocation6 + $0x608] sm:$0xff]
    %v242 = vld [vmem:[#allocation6 + $0x610] sm:$0xff]
    %v243 = vld [vmem:[#allocation6 + $0x618] sm:$0xff]
    %v244 = vld [vmem:[#allocation6 + $0x620] sm:$0xff]
    %v245 = vld [vmem:[#allocation6 + $0x628] sm:$0xff]
    %v246 = vld [vmem:[#allocation6 + $0x630] sm:$0xff]
    %v247 = vld [vmem:[#allocation6 + $0x638] sm:$0xff]
    %v248 = vld [vmem:[#allocation6 + $0x640] sm:$0xff]
    %v249 = vld [vmem:[#allocation6 + $0x648] sm:$0xff]
    %v250 = vld [vmem:[#allocation6 + $0x650] sm:$0xff]
    %v251 = vld [vmem:[#allocation6 + $0x658] sm:$0xff]
    %v252 = vld [vmem:[#allocation6 + $0x660] sm:$0xff]
    %v253 = vld [vmem:[#allocation6 + $0x668] sm:$0xff]
    %v254 = vld [vmem:[#allocation6 + $0x670] sm:$0xff]
    %v255 = vld [vmem:[#allocation6 + $0x678] sm:$0xff]
    %v256 = vld [vmem:[#allocation6 + $0x680] sm:$0xff]
    %v257 = vld [vmem:[#allocation6 + $0x688] sm:$0xff]
    %v258 = vld [vmem:[#allocation6 + $0x690] sm:$0xff]
    %v259 = vld [vmem:[#allocation6 + $0x698] sm:$0xff]
    %v260 = vld [vmem:[#allocation6 + $0x6a0] sm:$0xff]
    %v261 = vld [vmem:[#allocation6 + $0x6a8] sm:$0xff]
    %v262 = vld [vmem:[#allocation6 + $0x6b0] sm:$0xff]
    %v263 = vld [vmem:[#allocation6 + $0x6b8] sm:$0xff]
    %v264 = vld [vmem:[#allocation6 + $0x6c0] sm:$0xff]
    %v265 = vld [vmem:[#allocation6 + $0x6c8] sm:$0xff]
    %v266 = vld [vmem:[#allocation6 + $0x6d0] sm:$0xff]
    %v267 = vld [vmem:[#allocation6 + $0x6d8] sm:$0xff]
    %v268 = vld [vmem:[#allocation6 + $0x6e0] sm:$0xff]
    %v269 = vld [vmem:[#allocation6 + $0x6e8] sm:$0xff]
    %v270 = vld [vmem:[#allocation6 + $0x6f0] sm:$0xff]
    %v271 = vld [vmem:[#allocation6 + $0x6f8] sm:$0xff]
    %v272 = vld [vmem:[#allocation6 + $0x700] sm:$0xff]
    %v273 = vld [vmem:[#allocation6 + $0x708] sm:$0xff]
    %v274 = vld [vmem:[#allocation6 + $0x710] sm:$0xff]
    %v275 = vld [vmem:[#allocation6 + $0x718] sm:$0xff]
    %v276 = vld [vmem:[#allocation6 + $0x720] sm:$0xff]
    %v277 = vld [vmem:[#allocation6 + $0x728] sm:$0xff]
    %v278 = vld [vmem:[#allocation6 + $0x730] sm:$0xff]
    %v279 = vld [vmem:[#allocation6 + $0x738] sm:$0xff]
    %v280 = vld [vmem:[#allocation6 + $0x740] sm:$0xff]
    %v281 = vld [vmem:[#allocation6 + $0x748] sm:$0xff]
    %v282 = vld [vmem:[#allocation6 + $0x750] sm:$0xff]
    %v283 = vld [vmem:[#allocation6 + $0x758] sm:$0xff]
    %v284 = vld [vmem:[#allocation6 + $0x760] sm:$0xff]
    %v285 = vld [vmem:[#allocation6 + $0x768] sm:$0xff]
    %v286 = vld [vmem:[#allocation6 + $0x770] sm:$0xff]
    %v287 = vld [vmem:[#allocation6 + $0x778] sm:$0xff]
    %v288 = vld [vmem:[#allocation6 + $0x780] sm:$0xff]
    %v289 = vld [vmem:[#allocation6 + $0x788] sm:$0xff]
    %v290 = vld [vmem:[#allocation6 + $0x790] sm:$0xff]
    %v291 = vld [vmem:[#allocation6 + $0x798] sm:$0xff]
    %v292 = vld [vmem:[#allocation6 + $0x7a0] sm:$0xff]
    %v293 = vld [vmem:[#allocation6 + $0x7a8] sm:$0xff]
    %v294 = vld [vmem:[#allocation6 + $0x7b0] sm:$0xff]
    %v295 = vld [vmem:[#allocation6 + $0x7b8] sm:$0xff]
    %v296 = vld [vmem:[#allocation6 + $0x7c0] sm:$0xff]
    %v297 = vld [vmem:[#allocation6 + $0x7c8] sm:$0xff]
    %v298 = vld [vmem:[#allocation6 + $0x7d0] sm:$0xff]
    %v299 = vld [vmem:[#allocation6 + $0x7d8] sm:$0xff]
    %v300 = vld [vmem:[#allocation6 + $0x7e0] sm:$0xff]
    %v301 = vld [vmem:[#allocation6 + $0x7e8] sm:$0xff]
    %v302 = vld [vmem:[#allocation6 + $0x7f0] sm:$0xff]
    %v303 = vld [vmem:[#allocation6 + $0x7f8] sm:$0xff]
    %s304 = sld [smem:[#allocation2]]
    %v305 = vstv %s304
    %v308 = vperm.slane %v46, 0
    %v309 = vperm.slane %v46, 1
    %v310 = vperm.slane %v46, 2
    %v311 = vperm.slane %v46, 3
    %v312 = vperm.slane %v46, 4
    %v313 = vperm.slane %v46, 5
    %v314 = vperm.slane %v46, 6
    %v315 = vperm.slane %v46, 7
    %v316 = vperm.slane %v47, 0
    %v317 = vperm.slane %v47, 1
    %v318 = vperm.slane %v47, 2
    %v319 = vperm.slane %v47, 3
    %v320 = vperm.slane %v47, 4
    %v321 = vperm.slane %v47, 5
    %v322 = vperm.slane %v47, 6
    %v323 = vperm.slane %v47, 7
    %340 = vmatpush.msra.mxu0 %v63
    %341 = vmatpush.msra.mxu0 %v62
    %342 = vmatpush.msra.mxu0 %v61
    %343 = vmatpush.msra.mxu0 %v60
    %344 = vmatpush.msra.mxu0 %v59
    %345 = vmatpush.msra.mxu0 %v58
    %346 = vmatpush.msra.mxu0 %v57
    %347 = vmatpush.msra.mxu0 %v56
    %348 = vmatpush.msra.mxu0 %v55
    %349 = vmatpush.msra.mxu0 %v54
    %350 = vmatpush.msra.mxu0 %v53
    %351 = vmatpush.msra.mxu0 %v52
    %352 = vmatpush.msra.mxu0 %v51
    %353 = vmatpush.msra.mxu0 %v50
    %354 = vmatpush.msra.mxu0 %v49
    %355 = vmatpush.msra.mxu0 %v48
    %356 = vmatmul.f32.gmra.mxu0 %v308
    %v357 = vpop.f32.mrf.mxu0
    %v358 = vadd.f32 %v305, %v357
    %359 = vdwg.mxu0
    %360 = vmatpush.msra.mxu0 %v79
    %361 = vmatpush.msra.mxu0 %v78
    %362 = vmatpush.msra.mxu0 %v77
    %363 = vmatpush.msra.mxu0 %v76
    %364 = vmatpush.msra.mxu0 %v75
    %365 = vmatpush.msra.mxu0 %v74
    %366 = vmatpush.msra.mxu0 %v73
    %367 = vmatpush.msra.mxu0 %v72
    %368 = vmatpush.msra.mxu0 %v71
    %369 = vmatpush.msra.mxu0 %v70
    %370 = vmatpush.msra.mxu0 %v69
    %371 = vmatpush.msra.mxu0 %v68
    %372 = vmatpush.msra.mxu0 %v67
    %373 = vmatpush.msra.mxu0 %v66
    %374 = vmatpush.msra.mxu0 %v65
    %375 = vmatpush.msra.mxu0 %v64
    %376 = vmatmul.f32.gmra.mxu0 %v309
    %v377 = vpop.f32.mrf.mxu0
    %v378 = vadd.f32 %v358, %v377
    %379 = vdwg.mxu0
    %380 = vmatpush.msra.mxu0 %v95
    %381 = vmatpush.msra.mxu0 %v94
    %382 = vmatpush.msra.mxu0 %v93
    %383 = vmatpush.msra.mxu0 %v92
    %384 = vmatpush.msra.mxu0 %v91
    %385 = vmatpush.msra.mxu0 %v90
    %386 = vmatpush.msra.mxu0 %v89
    %387 = vmatpush.msra.mxu0 %v88
    %388 = vmatpush.msra.mxu0 %v87
    %389 = vmatpush.msra.mxu0 %v86
    %390 = vmatpush.msra.mxu0 %v85
    %391 = vmatpush.msra.mxu0 %v84
    %392 = vmatpush.msra.mxu0 %v83
    %393 = vmatpush.msra.mxu0 %v82
    %394 = vmatpush.msra.mxu0 %v81
    %395 = vmatpush.msra.mxu0 %v80
    %396 = vmatmul.f32.gmra.mxu0 %v310
    %v397 = vpop.f32.mrf.mxu0
    %v398 = vadd.f32 %v378, %v397
    %399 = vdwg.mxu0
    %400 = vmatpush.msra.mxu0 %v111
    %401 = vmatpush.msra.mxu0 %v110
    %402 = vmatpush.msra.mxu0 %v109
    %403 = vmatpush.msra.mxu0 %v108
    %404 = vmatpush.msra.mxu0 %v107
    %405 = vmatpush.msra.mxu0 %v106
    %406 = vmatpush.msra.mxu0 %v105
    %407 = vmatpush.msra.mxu0 %v104
    %408 = vmatpush.msra.mxu0 %v103
    %409 = vmatpush.msra.mxu0 %v102
    %410 = vmatpush.msra.mxu0 %v101
    %411 = vmatpush.msra.mxu0 %v100
    %412 = vmatpush.msra.mxu0 %v99
    %413 = vmatpush.msra.mxu0 %v98
    %414 = vmatpush.msra.mxu0 %v97
    %415 = vmatpush.msra.mxu0 %v96
    %416 = vmatmul.f32.gmra.mxu0 %v311
    %v417 = vpop.f32.mrf.mxu0
    %v418 = vadd.f32 %v398, %v417
    %419 = vdwg.mxu0
    %420 = vmatpush.msra.mxu0 %v127
    %421 = vmatpush.msra.mxu0 %v126
    %422 = vmatpush.msra.mxu0 %v125
    %423 = vmatpush.msra.mxu0 %v124
    %424 = vmatpush.msra.mxu0 %v123
    %425 = vmatpush.msra.mxu0 %v122
    %426 = vmatpush.msra.mxu0 %v121
    %427 = vmatpush.msra.mxu0 %v120
    %428 = vmatpush.msra.mxu0 %v119
    %429 = vmatpush.msra.mxu0 %v118
    %430 = vmatpush.msra.mxu0 %v117
    %431 = vmatpush.msra.mxu0 %v116
    %432 = vmatpush.msra.mxu0 %v115
    %433 = vmatpush.msra.mxu0 %v114
    %434 = vmatpush.msra.mxu0 %v113
    %435 = vmatpush.msra.mxu0 %v112
    %436 = vmatmul.f32.gmra.mxu0 %v312
    %v437 = vpop.f32.mrf.mxu0
    %v438 = vadd.f32 %v418, %v437
    %439 = vdwg.mxu0
    %440 = vmatpush.msra.mxu0 %v143
    %441 = vmatpush.msra.mxu0 %v142
    %442 = vmatpush.msra.mxu0 %v141
    %443 = vmatpush.msra.mxu0 %v140
    %444 = vmatpush.msra.mxu0 %v139
    %445 = vmatpush.msra.mxu0 %v138
    %446 = vmatpush.msra.mxu0 %v137
    %447 = vmatpush.msra.mxu0 %v136
    %448 = vmatpush.msra.mxu0 %v135
    %449 = vmatpush.msra.mxu0 %v134
    %450 = vmatpush.msra.mxu0 %v133
    %451 = vmatpush.msra.mxu0 %v132
    %452 = vmatpush.msra.mxu0 %v131
    %453 = vmatpush.msra.mxu0 %v130
    %454 = vmatpush.msra.mxu0 %v129
    %455 = vmatpush.msra.mxu0 %v128
    %456 = vmatmul.f32.gmra.mxu0 %v313
    %v457 = vpop.f32.mrf.mxu0
    %v458 = vadd.f32 %v438, %v457
    %459 = vdwg.mxu0
    %460 = vmatpush.msra.mxu0 %v159
    %461 = vmatpush.msra.mxu0 %v158
    %462 = vmatpush.msra.mxu0 %v157
    %463 = vmatpush.msra.mxu0 %v156
    %464 = vmatpush.msra.mxu0 %v155
    %465 = vmatpush.msra.mxu0 %v154
    %466 = vmatpush.msra.mxu0 %v153
    %467 = vmatpush.msra.mxu0 %v152
    %468 = vmatpush.msra.mxu0 %v151
    %469 = vmatpush.msra.mxu0 %v150
    %470 = vmatpush.msra.mxu0 %v149
    %471 = vmatpush.msra.mxu0 %v148
    %472 = vmatpush.msra.mxu0 %v147
    %473 = vmatpush.msra.mxu0 %v146
    %474 = vmatpush.msra.mxu0 %v145
    %475 = vmatpush.msra.mxu0 %v144
    %476 = vmatmul.f32.gmra.mxu0 %v314
    %v477 = vpop.f32.mrf.mxu0
    %v478 = vadd.f32 %v458, %v477
    %479 = vdwg.mxu0
    %480 = vmatpush.msra.mxu0 %v175
    %481 = vmatpush.msra.mxu0 %v174
    %482 = vmatpush.msra.mxu0 %v173
    %483 = vmatpush.msra.mxu0 %v172
    %484 = vmatpush.msra.mxu0 %v171
    %485 = vmatpush.msra.mxu0 %v170
    %486 = vmatpush.msra.mxu0 %v169
    %487 = vmatpush.msra.mxu0 %v168
    %488 = vmatpush.msra.mxu0 %v167
    %489 = vmatpush.msra.mxu0 %v166
    %490 = vmatpush.msra.mxu0 %v165
    %491 = vmatpush.msra.mxu0 %v164
    %492 = vmatpush.msra.mxu0 %v163
    %493 = vmatpush.msra.mxu0 %v162
    %494 = vmatpush.msra.mxu0 %v161
    %495 = vmatpush.msra.mxu0 %v160
    %496 = vmatmul.f32.gmra.mxu0 %v315
    %v497 = vpop.f32.mrf.mxu0
    %v498 = vadd.f32 %v478, %v497
    %499 = vdwg.mxu0
    %500 = vmatpush.msra.mxu0 %v191
    %501 = vmatpush.msra.mxu0 %v190
    %502 = vmatpush.msra.mxu0 %v189
    %503 = vmatpush.msra.mxu0 %v188
    %504 = vmatpush.msra.mxu0 %v187
    %505 = vmatpush.msra.mxu0 %v186
    %506 = vmatpush.msra.mxu0 %v185
    %507 = vmatpush.msra.mxu0 %v184
    %508 = vmatpush.msra.mxu0 %v183
    %509 = vmatpush.msra.mxu0 %v182
    %510 = vmatpush.msra.mxu0 %v181
    %511 = vmatpush.msra.mxu0 %v180
    %512 = vmatpush.msra.mxu0 %v179
    %513 = vmatpush.msra.mxu0 %v178
    %514 = vmatpush.msra.mxu0 %v177
    %515 = vmatpush.msra.mxu0 %v176
    %516 = vmatmul.f32.gmra.mxu0 %v316
    %v517 = vpop.f32.mrf.mxu0
    %v518 = vadd.f32 %v498, %v517
    %519 = vdwg.mxu0
    %520 = vmatpush.msra.mxu0 %v207
    %521 = vmatpush.msra.mxu0 %v206
    %522 = vmatpush.msra.mxu0 %v205
    %523 = vmatpush.msra.mxu0 %v204
    %524 = vmatpush.msra.mxu0 %v203
    %525 = vmatpush.msra.mxu0 %v202
    %526 = vmatpush.msra.mxu0 %v201
    %527 = vmatpush.msra.mxu0 %v200
    %528 = vmatpush.msra.mxu0 %v199
    %529 = vmatpush.msra.mxu0 %v198
    %530 = vmatpush.msra.mxu0 %v197
    %531 = vmatpush.msra.mxu0 %v196
    %532 = vmatpush.msra.mxu0 %v195
    %533 = vmatpush.msra.mxu0 %v194
    %534 = vmatpush.msra.mxu0 %v193
    %535 = vmatpush.msra.mxu0 %v192
    %536 = vmatmul.f32.gmra.mxu0 %v317
    %v537 = vpop.f32.mrf.mxu0
    %v538 = vadd.f32 %v518, %v537
    %539 = vdwg.mxu0
    %540 = vmatpush.msra.mxu0 %v223
    %541 = vmatpush.msra.mxu0 %v222
    %542 = vmatpush.msra.mxu0 %v221
    %543 = vmatpush.msra.mxu0 %v220
    %544 = vmatpush.msra.mxu0 %v219
    %545 = vmatpush.msra.mxu0 %v218
    %546 = vmatpush.msra.mxu0 %v217
    %547 = vmatpush.msra.mxu0 %v216
    %548 = vmatpush.msra.mxu0 %v215
    %549 = vmatpush.msra.mxu0 %v214
    %550 = vmatpush.msra.mxu0 %v213
    %551 = vmatpush.msra.mxu0 %v212
    %552 = vmatpush.msra.mxu0 %v211
    %553 = vmatpush.msra.mxu0 %v210
    %554 = vmatpush.msra.mxu0 %v209
    %555 = vmatpush.msra.mxu0 %v208
    %556 = vmatmul.f32.gmra.mxu0 %v318
    %v557 = vpop.f32.mrf.mxu0
    %v558 = vadd.f32 %v538, %v557
    %559 = vdwg.mxu0
    %560 = vmatpush.msra.mxu0 %v239
    %561 = vmatpush.msra.mxu0 %v238
    %562 = vmatpush.msra.mxu0 %v237
    %563 = vmatpush.msra.mxu0 %v236
    %564 = vmatpush.msra.mxu0 %v235
    %565 = vmatpush.msra.mxu0 %v234
    %566 = vmatpush.msra.mxu0 %v233
    %567 = vmatpush.msra.mxu0 %v232
    %568 = vmatpush.msra.mxu0 %v231
    %569 = vmatpush.msra.mxu0 %v230
    %570 = vmatpush.msra.mxu0 %v229
    %571 = vmatpush.msra.mxu0 %v228
    %572 = vmatpush.msra.mxu0 %v227
    %573 = vmatpush.msra.mxu0 %v226
    %574 = vmatpush.msra.mxu0 %v225
    %575 = vmatpush.msra.mxu0 %v224
    %576 = vmatmul.f32.gmra.mxu0 %v319
    %v577 = vpop.f32.mrf.mxu0
    %v578 = vadd.f32 %v558, %v577
    %579 = vdwg.mxu0
    %580 = vmatpush.msra.mxu0 %v255
    %581 = vmatpush.msra.mxu0 %v254
    %582 = vmatpush.msra.mxu0 %v253
    %583 = vmatpush.msra.mxu0 %v252
    %584 = vmatpush.msra.mxu0 %v251
    %585 = vmatpush.msra.mxu0 %v250
    %586 = vmatpush.msra.mxu0 %v249
    %587 = vmatpush.msra.mxu0 %v248
    %588 = vmatpush.msra.mxu0 %v247
    %589 = vmatpush.msra.mxu0 %v246
    %590 = vmatpush.msra.mxu0 %v245
    %591 = vmatpush.msra.mxu0 %v244
    %592 = vmatpush.msra.mxu0 %v243
    %593 = vmatpush.msra.mxu0 %v242
    %594 = vmatpush.msra.mxu0 %v241
    %595 = vmatpush.msra.mxu0 %v240
    %596 = vmatmul.f32.gmra.mxu0 %v320
    %v597 = vpop.f32.mrf.mxu0
    %v598 = vadd.f32 %v578, %v597
    %599 = vdwg.mxu0
    %600 = vmatpush.msra.mxu0 %v271
    %601 = vmatpush.msra.mxu0 %v270
    %602 = vmatpush.msra.mxu0 %v269
    %603 = vmatpush.msra.mxu0 %v268
    %604 = vmatpush.msra.mxu0 %v267
    %605 = vmatpush.msra.mxu0 %v266
    %606 = vmatpush.msra.mxu0 %v265
    %607 = vmatpush.msra.mxu0 %v264
    %608 = vmatpush.msra.mxu0 %v263
    %609 = vmatpush.msra.mxu0 %v262
    %610 = vmatpush.msra.mxu0 %v261
    %611 = vmatpush.msra.mxu0 %v260
    %612 = vmatpush.msra.mxu0 %v259
    %613 = vmatpush.msra.mxu0 %v258
    %614 = vmatpush.msra.mxu0 %v257
    %615 = vmatpush.msra.mxu0 %v256
    %616 = vmatmul.f32.gmra.mxu0 %v321
    %v617 = vpop.f32.mrf.mxu0
    %v618 = vadd.f32 %v598, %v617
    %619 = vdwg.mxu0
    %620 = vmatpush.msra.mxu0 %v287
    %621 = vmatpush.msra.mxu0 %v286
    %622 = vmatpush.msra.mxu0 %v285
    %623 = vmatpush.msra.mxu0 %v284
    %624 = vmatpush.msra.mxu0 %v283
    %625 = vmatpush.msra.mxu0 %v282
    %626 = vmatpush.msra.mxu0 %v281
    %627 = vmatpush.msra.mxu0 %v280
    %628 = vmatpush.msra.mxu0 %v279
    %629 = vmatpush.msra.mxu0 %v278
    %630 = vmatpush.msra.mxu0 %v277
    %631 = vmatpush.msra.mxu0 %v276
    %632 = vmatpush.msra.mxu0 %v275
    %633 = vmatpush.msra.mxu0 %v274
    %634 = vmatpush.msra.mxu0 %v273
    %635 = vmatpush.msra.mxu0 %v272
    %636 = vmatmul.f32.gmra.mxu0 %v322
    %v637 = vpop.f32.mrf.mxu0
    %v638 = vadd.f32 %v618, %v637
    %639 = vdwg.mxu0
    %640 = vmatpush.msra.mxu0 %v303
    %641 = vmatpush.msra.mxu0 %v302
    %642 = vmatpush.msra.mxu0 %v301
    %643 = vmatpush.msra.mxu0 %v300
    %644 = vmatpush.msra.mxu0 %v299
    %645 = vmatpush.msra.mxu0 %v298
    %646 = vmatpush.msra.mxu0 %v297
    %647 = vmatpush.msra.mxu0 %v296
    %648 = vmatpush.msra.mxu0 %v295
    %649 = vmatpush.msra.mxu0 %v294
    %650 = vmatpush.msra.mxu0 %v293
    %651 = vmatpush.msra.mxu0 %v292
    %652 = vmatpush.msra.mxu0 %v291
    %653 = vmatpush.msra.mxu0 %v290
    %654 = vmatpush.msra.mxu0 %v289
    %655 = vmatpush.msra.mxu0 %v288
    %656 = vmatmul.f32.gmra.mxu0 %v323
    %v657 = vpop.f32.mrf.mxu0
    %v658 = vadd.f32 %v638, %v657
    %659 = vdwg.mxu0
    %v660 = vmax.f32 %v658, 0.0
    %661 = vst [vmem:[#allocation8] sm:$0x1] %v660
    // Predicated region
    $region22: #{tpu_custom_call.1} parent=1 // pred_check
      _
    $region23: #{tpu_custom_call.1} parent=1 // pred_check_branch
      %663 = sbr.rel (0) target = $region25
    $region24: #{tpu_custom_call.1} parent=1 // pred_region
      %665 = vsyncadd [#allocation5], 0
      %s667 = sshll.u32 [#allocation8], 4
      %s668 = int_to_ptr.vmem [resolvable:$true] %s667
      %s669 = sshll.u32 %s3, 4
      %s670 = int_to_ptr.hbm [resolvable:$true] %s669
      %672 = dma.vmem_to_hbm [thread:$0]  %s668, 16, %s670, [#allocation5]
    $region25: #{tpu_custom_call.1} parent=1 // pred_fallthru
      _
    // Predicated region
    $region26: #{tpu_custom_call.1} parent=1 // pred_check
      _
    $region27: #{tpu_custom_call.1} parent=1 // pred_check_branch
      %674 = sbr.rel (0) target = $region29
    $region28: #{tpu_custom_call.1} parent=1 // pred_region
      %676 = dma.done [#allocation5], 16
    $region29: #{tpu_custom_call.1} parent=1 // pred_fallthru
      _
    %677 = vsyncpa [#allocation4], 1
    %678 = vsyncpa [#allocation7], 1
    %679 = vsyncpa [#allocation5], 1

</llo_original>
